<compile_context>
chip_gen: v5e
topology: v5e:2x2
jax: 0.10.0
libtpu: 0.0.40
codegen_flags: <defaults>
</compile_context>

<pallas_src>
import math

import jax
import jax.numpy as jnp
import numpy as np
from jax.experimental import pallas as pl
from jax.experimental.pallas import tpu as pltpu


def _time_encode_kernel(t_ref, w_ref, o_ref):
    """t_ref: (TM, FOLD) f32, w_ref: (FOLD, FOLD*dim) f32, o_ref: (TM, FOLD*dim) f32.

    out[m, j*dim + k] = cos(t[m, j] * w[k]).  w_ref is block-diagonal
    (Wp[j, j*dim+k] = w[k], zeros elsewhere), so one MXU matmul performs the
    fold expansion and the multiply; the VPU only runs the cos polynomial.
    """
    t = t_ref[...]
    w = w_ref[...]
    if t.shape[-1] == 1:
        # fold == 1 (output row already lane-dense, or fold disabled for an
        # awkward dim): plain broadcast multiply, no MXU needed.
        o_ref[...] = jnp.cos(t * w)
    else:
        o_ref[...] = jnp.cos(
            jnp.dot(t, w,
                    precision=jax.lax.Precision.HIGHEST,
                    preferred_element_type=jnp.float32))


def _choose_fold(dim, n, *, target_width=512, max_width=2048):
    """How many consecutive time points to pack per output row.

    fold*dim is a multiple of 128 whenever reasonably possible (unmasked,
    lane-dense stores); among lane-dense candidates the widest fold dividing n
    is preferred so no output padding / post-kernel slice copy is needed.
    """
    base_fold = math.lcm(dim, 128) // dim
    if base_fold * dim > max_width:
        return 1                          # awkward dim: unpacked (masked) rows
    widen = max(1, target_width // (base_fold * dim))
    for m in range(widen, 0, -1):         # widest pad-free candidate first
        f = base_fold * m
        if n % f == 0:
            return f
    return base_fold * widen              # ragged n: wide fold + tiny pad


def time_encode(t, weight, *, block_bytes=2 << 20, min_grid_steps=8):
    """Pallas TimeEncode forward.  t: any shape; returns (t.size, dim) float32.

    The module's bias is identically zero and frozen, so it is folded out.
    """
    dim = int(weight.shape[0])
    t_flat = jnp.ravel(t).astype(jnp.float32)
    n = int(t_flat.shape[0])
    if n == 0:
        return jnp.zeros((0, dim), jnp.float32)

    fold = _choose_fold(dim, n)
    width = fold * dim

    pad = (-n) % fold                     # at most fold-1 elements of t padding
    if pad:
        t_flat = jnp.pad(t_flat, (0, pad))
    rows = (n + pad) // fold
    t_packed = t_flat.reshape(rows, fold)

    # Block-diagonal packed weight Wp[j, j*dim + k] = w[k].  Tiny (fold, width)
    # array, fully determined by (weight, fold); constant-folded/hoisted under
    # jit so it is not rebuilt per step.  Kept as a kernel input with a
    # constant index_map (DMA'd once, VMEM-resident).
    w_row = weight.reshape(1, dim).astype(jnp.float32)
    if fold == 1:
        wp = w_row
    else:
        wp = (jnp.eye(fold, dtype=jnp.float32)[:, :, None] * w_row[None]
              ).reshape(fold, width)

    # Row tile: ~2 MiB output block (double-buffered it fits the scoped VMEM
    # limit on every generation, including v7x's 64 MiB physical VMEM), rounded
    # to a sublane multiple, and capped so moderate inputs still get
    # >= min_grid_steps grid steps (pipeline overlap + 2-TC sharding on v7x).
    cap = max(8, ((block_bytes // (width * 4)) // 8) * 8)
    tm = min(cap, ((pl.cdiv(rows, min_grid_steps) + 7) // 8) * 8)
    if tm >= rows:
        tm = rows                         # single block; full-dim block is legal
    grid = (pl.cdiv(rows, tm),)

    out = pl.pallas_call(
        _time_encode_kernel,
        out_shape=jax.ShapeDtypeStruct((rows, width), jnp.float32),
        grid_spec=pltpu.PrefetchScalarGridSpec(
            num_scalar_prefetch=0,
            grid=grid,
            in_specs=[
                pl.BlockSpec((tm, fold), lambda i: (i, 0)),     # packed t tile
                pl.BlockSpec((fold, width), lambda i: (0, 0)),  # packed weight
            ],
            # NOTE: pipeline_mode=pl.Buffered(3) on this out_spec is a sweep
            # knob if the trace shows exposed output writeback DMA.
            out_specs=pl.BlockSpec((tm, width), lambda i: (i, 0)),
        ),
        compiler_params=pltpu.CompilerParams(
            dimension_semantics=("parallel",)),   # shard grid across TCs (v7x)
    )(t_packed, wp)

    out = out.reshape(rows * fold, dim)   # free row-major reinterpretation
    if pad:
        # Only reached when n is not divisible by any lane-dense fold.
        # TODO(synk): absorb the ragged tail inside the kernel (flat 1-D output
        # relying on Pallas partial-block clipping) to remove this copy.
        out = out[:n]
    return out


def make_time_encode_params(dim):
    # Deterministic frozen parameters, exactly as in TimeEncode.reset_parameters.
    w = (1.0 / 10 ** np.linspace(0, 9, dim, dtype=np.float32)).astype(np.float32)
    return jnp.asarray(w)


if __name__ == "__main__":
    dim = 32
    weight = make_time_encode_params(dim)

    key = jax.random.PRNGKey(0)
    # Small timestamp batches consistent with the module's forward.
    t1 = jax.random.uniform(key, (2, 8), dtype=jnp.float32) * 100.0                         # N=16: pad-free wide path
    t2 = jax.random.uniform(jax.random.fold_in(key, 1), (3, 7), dtype=jnp.float32) * 100.0  # N=21: ragged path

    for t in (t1, t2):
        out = jax.block_until_ready(time_encode(t, weight))
        ref = jnp.cos(t.reshape(-1, 1) * weight.reshape(1, dim))
        assert out.shape == (t.size, dim)
        # MXU f32 product + f32 cos range reduction at args up to ~1e2 make a
        # bit-level tolerance inappropriate (see review correctness note).
        np.testing.assert_allclose(np.asarray(out), np.asarray(ref),
                                   rtol=1e-4, atol=5e-4)

    print("KERNEL_OK")
</pallas_src>

<mosaic_0001>
module attributes {stable_mosaic.version = 11 : i64} {
  func.func @_time_encode_kernel(%arg0: i32, %arg1: memref<1x16xf32, #tpu.memory_space<vmem>>, %arg2: memref<16x512xf32, #tpu.memory_space<vmem>>, %arg3: memref<1x512xf32, #tpu.memory_space<vmem>>) attributes {dimension_semantics = [#tpu.dimension_semantics<parallel>], iteration_bounds = array<i64: 1>, scalar_prefetch = 0 : i64, scratch_operands = 0 : i64, tpu.core_type = #tpu.core_type<tc>, window_params = [{transform_indices = @transform_0, window_bounds = array<i64: 1, 16>}, {pipeline_mode = #tpu.pipeline_mode<synchronous>, transform_indices = @transform_1, window_bounds = array<i64: 16, 512>}, {transform_indices = @transform_2, window_bounds = array<i64: 1, 512>}]} {
    %c0 = arith.constant 0 : index
    %c0_0 = arith.constant 0 : index
    %0 = vector.load %arg1[%c0, %c0_0] : memref<1x16xf32, #tpu.memory_space<vmem>>, vector<1x16xf32>
    %c0_1 = arith.constant 0 : index
    %c0_2 = arith.constant 0 : index
    %1 = vector.load %arg2[%c0_1, %c0_2] : memref<16x512xf32, #tpu.memory_space<vmem>>, vector<16x512xf32>
    %cst = arith.constant dense<0.000000e+00> : vector<1x512xf32>
    %2 = tpu.matmul %0, %1, %cst {dimension_numbers = #tpu.dot_dimension_numbers<[1], [0], [0], [1], [0, 0, 1, 1], [], []>, precision = #tpu.contract_precision<fp32>} : vector<1x16xf32>, vector<16x512xf32>, vector<1x512xf32> -> vector<1x512xf32>
    %3 = math.cos %2 : vector<1x512xf32>
    %c0_3 = arith.constant 0 : index
    %c0_4 = arith.constant 0 : index
    %4 = vector.load %arg3[%c0_3, %c0_4] : memref<1x512xf32, #tpu.memory_space<vmem>>, vector<1x512xf32>
    tpu.vector_store %arg3[%c0_3, %c0_4], %3 {strides = array<i32>} : memref<1x512xf32, #tpu.memory_space<vmem>>, vector<1x512xf32>,
    return
  }
  func.func @transform_0(%arg0: i32) -> (i32, i32) {
    %c0_i32 = arith.constant 0 : i32
    %c0_i32_0 = arith.constant 0 : i32
    return %arg0, %c0_i32 : i32, i32
  }
  func.func @transform_1(%arg0: i32) -> (i32, i32) {
    %c0_i32 = arith.constant 0 : i32
    %c0_i32_0 = arith.constant 0 : i32
    %c0_i32_1 = arith.constant 0 : i32
    return %c0_i32, %c0_i32_0 : i32, i32
  }
  func.func @transform_2(%arg0: i32) -> (i32, i32) {
    %c0_i32 = arith.constant 0 : i32
    %c0_i32_0 = arith.constant 0 : i32
    return %arg0, %c0_i32 : i32, i32
  }
}

</mosaic_0001>

<llo_original>
// kernel: tpu_custom_call.1
$region0: #{tpu_custom_call.1}
  #allocation0 [shape = 'u32[]', space=smem, size = 0x4, offset = 0x4, fixed_abs, tag = 'smem constant byte address 0x4 - core index']
  #allocation1 [shape = 'u32[72,128]{1,0:T(1,128)}', space=vmem, size = 0x9000, scoped, tag = 'internal scratch']
  %s0 = inlined_call_operand.hbm [shape: f32[1,16], index: 0, kind: input, shape index: {}]
  %s1 = inlined_call_operand.hbm [shape: f32[16,512], index: 1, kind: input, shape index: {}]
  %s2 = inlined_call_operand.hbm [shape: f32[1,512], index: 2, kind: output, shape index: {}]
  %s3 = sld [smem:[#allocation0]]
  $region26: #{tpu_custom_call.1} parent=0
    _
  %s5 = ssub.s32 1, %s3
  %s6 = scalar_select 0, %s5, %s3
  $region1: #{tpu_custom_call.1} parent=0
    #allocation2 [shape = 'u8[512]{0}', space=vmem, size = 0x400, scoped, tag = 'input window, operand 0, single buffered']
    #allocation3 [shape = 's32[1]{0}', space=sflag, size = 0x4, scoped, tag = 'scoped memory for tpu_custom_call.1']
    #allocation4 [shape = 's32[1]{0}', space=sflag, size = 0x4, scoped, tag = 'scoped memory for tpu_custom_call.1']
    #allocation5 [shape = 'u8[32768]{0}', space=vmem, size = 0x8000, scoped, tag = 'input window, operand 1, single buffered']
    #allocation6 [shape = 's32[1]{0}', space=sflag, size = 0x4, scoped, tag = 'scoped memory for tpu_custom_call.1']
    #allocation7 [shape = 'u8[2048]{0}', space=vmem, size = 0x800, scoped, tag = 'output window, operand 0, single buffered']
    %7 = vsyncpa [#allocation3], 0
    %8 = vsyncpa [#allocation6], 0
    %9 = vsyncpa [#allocation4], 0
    // Predicated region
    $region2: #{tpu_custom_call.1} parent=1 // pred_check
      _
    $region3: #{tpu_custom_call.1} parent=1 // pred_check_branch
      %11 = sbr.rel (0) target = $region5
    $region4: #{tpu_custom_call.1} parent=1 // pred_region
      %13 = vsyncadd [#allocation3], 0
      %s15 = sshll.u32 %s0, 4
      %s16 = int_to_ptr.hbm [resolvable:$true] %s15
      %s17 = sshll.u32 [#allocation2], 4
      %s18 = int_to_ptr.vmem [resolvable:$true] %s17
      %20 = dma.hbm_to_vmem [thread:$0]  %s16, 16, %s18, [#allocation3]
    $region5: #{tpu_custom_call.1} parent=1 // pred_fallthru
      _
    // Predicated region
    $region6: #{tpu_custom_call.1} parent=1 // pred_check
      _
    $region7: #{tpu_custom_call.1} parent=1 // pred_check_branch
      %22 = sbr.rel (0) target = $region9
    $region8: #{tpu_custom_call.1} parent=1 // pred_region
      %24 = vsyncadd [#allocation6], 0
      %s25 = sshll.u32 %s1, 4
      %s26 = int_to_ptr.hbm [resolvable:$true] %s25
      %s27 = sshll.u32 [#allocation5], 4
      %s28 = int_to_ptr.vmem [resolvable:$true] %s27
      %33 = dma.hbm_to_vmem [thread:$0]  %s26, 1024, %s28, [#allocation6], 512, 512, 32
    $region9: #{tpu_custom_call.1} parent=1 // pred_fallthru
      _
    // Predicated region
    $region10: #{tpu_custom_call.1} parent=1 // pred_check
      _
    $region11: #{tpu_custom_call.1} parent=1 // pred_check_branch
      %35 = sbr.rel (0) target = $region13
    $region12: #{tpu_custom_call.1} parent=1 // pred_region
      %37 = dma.done [#allocation3], 16
    $region13: #{tpu_custom_call.1} parent=1 // pred_fallthru
      _
    // Predicated region
    $region14: #{tpu_custom_call.1} parent=1 // pred_check
      _
    $region15: #{tpu_custom_call.1} parent=1 // pred_check_branch
      %39 = sbr.rel (0) target = $region17
    $region16: #{tpu_custom_call.1} parent=1 // pred_region
      %41 = dma.done [#allocation6], 1024
    $region17: #{tpu_custom_call.1} parent=1 // pred_fallthru
      _
    %v42 = vld [vmem:[#allocation2] sm:$0x1]
    %v43 = vld [vmem:[#allocation5] sm:$0xff]
    %v44 = vld [vmem:[#allocation5 + $0x8] sm:$0xff]
    %v45 = vld [vmem:[#allocation5 + $0x10] sm:$0xff]
    %v46 = vld [vmem:[#allocation5 + $0x18] sm:$0xff]
    %v47 = vld [vmem:[#allocation5 + $0x20] sm:$0xff]
    %v48 = vld [vmem:[#allocation5 + $0x28] sm:$0xff]
    %v49 = vld [vmem:[#allocation5 + $0x30] sm:$0xff]
    %v50 = vld [vmem:[#allocation5 + $0x38] sm:$0xff]
    %vm51 = vcmask 130048
    %v53 = vsel %vm51, %v42, 0
    %55 = vmatpush.msra.mxu0 0.0
    %56 = vmatpush.msra.mxu0 0.0
    %57 = vmatpush.msra.mxu0 0.0
    %58 = vmatpush.msra.mxu0 0.0
    %59 = vmatpush.msra.mxu0 0.0
    %60 = vmatpush.msra.mxu0 0.0
    %61 = vmatpush.msra.mxu0 0.0
    %62 = vmatpush.msra.mxu0 0.0
    %63 = vmatpush.msra.mxu0 0.0
    %64 = vmatpush.msra.mxu0 0.0
    %65 = vmatpush.msra.mxu0 0.0
    %66 = vmatpush.msra.mxu0 0.0
    %67 = vmatpush.msra.mxu0 0.0
    %68 = vmatpush.msra.mxu0 0.0
    %v69 = vand.u32 %v47, 4294901760
    %70 = vmatpush.msra.mxu0 %v69
    %v71 = vand.u32 %v43, 4294901760
    %72 = vmatpush.msra.mxu0 %v71
    %v73 = vand.u32 %v53, 4294901760
    %v74 = vsub.f32 %v53, %v73
    %v75 = vand.u32 %v74, 4294901760
    %v76 = vsub.f32 %v74, %v75
    %v77 = vand.u32 %v76, 4294901760
    %78 = vmatmul.f32.gmra.mxu0 %v77
    %v79 = vpop.f32.mrf.mxu0
    %v80 = vadd.f32 0.0, %v79
    %81 = vdwg.mxu0
    %82 = vmatpush.msra.mxu0 0.0
    %83 = vmatpush.msra.mxu0 0.0
    %84 = vmatpush.msra.mxu0 0.0
    %85 = vmatpush.msra.mxu0 0.0
    %86 = vmatpush.msra.mxu0 0.0
    %87 = vmatpush.msra.mxu0 0.0
    %88 = vmatpush.msra.mxu0 0.0
    %89 = vmatpush.msra.mxu0 0.0
    %90 = vmatpush.msra.mxu0 0.0
    %91 = vmatpush.msra.mxu0 0.0
    %92 = vmatpush.msra.mxu0 0.0
    %93 = vmatpush.msra.mxu0 0.0
    %94 = vmatpush.msra.mxu0 0.0
    %95 = vmatpush.msra.mxu0 0.0
    %v96 = vand.u32 %v47, 4294901760
    %v97 = vsub.f32 %v47, %v96
    %v98 = vand.u32 %v97, 4294901760
    %v99 = vsub.f32 %v97, %v98
    %v100 = vand.u32 %v99, 4294901760
    %101 = vmatpush.msra.mxu0 %v100
    %v102 = vand.u32 %v43, 4294901760
    %v103 = vsub.f32 %v43, %v102
    %v104 = vand.u32 %v103, 4294901760
    %v105 = vsub.f32 %v103, %v104
    %v106 = vand.u32 %v105, 4294901760
    %107 = vmatpush.msra.mxu0 %v106
    %v108 = vand.u32 %v53, 4294901760
    %109 = vmatmul.f32.gmra.mxu0 %v108
    %v110 = vpop.f32.mrf.mxu0
    %v111 = vadd.f32 %v80, %v110
    %112 = vdwg.mxu0
    %113 = vmatpush.msra.mxu0 0.0
    %114 = vmatpush.msra.mxu0 0.0
    %115 = vmatpush.msra.mxu0 0.0
    %116 = vmatpush.msra.mxu0 0.0
    %117 = vmatpush.msra.mxu0 0.0
    %118 = vmatpush.msra.mxu0 0.0
    %119 = vmatpush.msra.mxu0 0.0
    %120 = vmatpush.msra.mxu0 0.0
    %121 = vmatpush.msra.mxu0 0.0
    %122 = vmatpush.msra.mxu0 0.0
    %123 = vmatpush.msra.mxu0 0.0
    %124 = vmatpush.msra.mxu0 0.0
    %125 = vmatpush.msra.mxu0 0.0
    %126 = vmatpush.msra.mxu0 0.0
    %v127 = vand.u32 %v47, 4294901760
    %v128 = vsub.f32 %v47, %v127
    %129 = vmatpush.msra.mxu0 %v128
    %v130 = vand.u32 %v43, 4294901760
    %v131 = vsub.f32 %v43, %v130
    %132 = vmatpush.msra.mxu0 %v131
    %v133 = vand.u32 %v53, 4294901760
    %v134 = vsub.f32 %v53, %v133
    %135 = vmatmul.f32.gmra.mxu0 %v134
    %v136 = vpop.f32.mrf.mxu0
    %v137 = vadd.f32 %v111, %v136
    %138 = vdwg.mxu0
    %139 = vmatpush.msra.mxu0 0.0
    %140 = vmatpush.msra.mxu0 0.0
    %141 = vmatpush.msra.mxu0 0.0
    %142 = vmatpush.msra.mxu0 0.0
    %143 = vmatpush.msra.mxu0 0.0
    %144 = vmatpush.msra.mxu0 0.0
    %145 = vmatpush.msra.mxu0 0.0
    %146 = vmatpush.msra.mxu0 0.0
    %147 = vmatpush.msra.mxu0 0.0
    %148 = vmatpush.msra.mxu0 0.0
    %149 = vmatpush.msra.mxu0 0.0
    %150 = vmatpush.msra.mxu0 0.0
    %151 = vmatpush.msra.mxu0 0.0
    %152 = vmatpush.msra.mxu0 0.0
    %v153 = vand.u32 %v47, 4294901760
    %154 = vmatpush.msra.mxu0 %v153
    %v155 = vand.u32 %v43, 4294901760
    %156 = vmatpush.msra.mxu0 %v155
    %v157 = vand.u32 %v53, 4294901760
    %v158 = vsub.f32 %v53, %v157
    %v159 = vand.u32 %v158, 4294901760
    %160 = vmatmul.f32.gmra.mxu0 %v159
    %v161 = vpop.f32.mrf.mxu0
    %v162 = vadd.f32 %v137, %v161
    %163 = vdwg.mxu0
    %164 = vmatpush.msra.mxu0 0.0
    %165 = vmatpush.msra.mxu0 0.0
    %166 = vmatpush.msra.mxu0 0.0
    %167 = vmatpush.msra.mxu0 0.0
    %168 = vmatpush.msra.mxu0 0.0
    %169 = vmatpush.msra.mxu0 0.0
    %170 = vmatpush.msra.mxu0 0.0
    %171 = vmatpush.msra.mxu0 0.0
    %172 = vmatpush.msra.mxu0 0.0
    %173 = vmatpush.msra.mxu0 0.0
    %174 = vmatpush.msra.mxu0 0.0
    %175 = vmatpush.msra.mxu0 0.0
    %176 = vmatpush.msra.mxu0 0.0
    %177 = vmatpush.msra.mxu0 0.0
    %v178 = vand.u32 %v47, 4294901760
    %v179 = vsub.f32 %v47, %v178
    %v180 = vand.u32 %v179, 4294901760
    %181 = vmatpush.msra.mxu0 %v180
    %v182 = vand.u32 %v43, 4294901760
    %v183 = vsub.f32 %v43, %v182
    %v184 = vand.u32 %v183, 4294901760
    %185 = vmatpush.msra.mxu0 %v184
    %v186 = vand.u32 %v53, 4294901760
    %187 = vmatmul.f32.gmra.mxu0 %v186
    %v188 = vpop.f32.mrf.mxu0
    %v189 = vadd.f32 %v162, %v188
    %190 = vdwg.mxu0
    %191 = vmatpush.msra.mxu0 0.0
    %192 = vmatpush.msra.mxu0 0.0
    %193 = vmatpush.msra.mxu0 0.0
    %194 = vmatpush.msra.mxu0 0.0
    %195 = vmatpush.msra.mxu0 0.0
    %196 = vmatpush.msra.mxu0 0.0
    %197 = vmatpush.msra.mxu0 0.0
    %198 = vmatpush.msra.mxu0 0.0
    %199 = vmatpush.msra.mxu0 0.0
    %200 = vmatpush.msra.mxu0 0.0
    %201 = vmatpush.msra.mxu0 0.0
    %202 = vmatpush.msra.mxu0 0.0
    %203 = vmatpush.msra.mxu0 0.0
    %204 = vmatpush.msra.mxu0 0.0
    %v205 = vand.u32 %v47, 4294901760
    %206 = vmatpush.msra.mxu0 %v205
    %v207 = vand.u32 %v43, 4294901760
    %208 = vmatpush.msra.mxu0 %v207
    %v209 = vand.u32 %v53, 4294901760
    %210 = vmatmul.f32.gmra.mxu0 %v209
    %v211 = vpop.f32.mrf.mxu0
    %v212 = vadd.f32 %v189, %v211
    %213 = vdwg.mxu0
    %214 = vmatpush.msra.mxu0 0.0
    %215 = vmatpush.msra.mxu0 0.0
    %216 = vmatpush.msra.mxu0 0.0
    %217 = vmatpush.msra.mxu0 0.0
    %218 = vmatpush.msra.mxu0 0.0
    %219 = vmatpush.msra.mxu0 0.0
    %220 = vmatpush.msra.mxu0 0.0
    %221 = vmatpush.msra.mxu0 0.0
    %222 = vmatpush.msra.mxu0 0.0
    %223 = vmatpush.msra.mxu0 0.0
    %224 = vmatpush.msra.mxu0 0.0
    %225 = vmatpush.msra.mxu0 0.0
    %226 = vmatpush.msra.mxu0 0.0
    %227 = vmatpush.msra.mxu0 0.0
    %v228 = vand.u32 %v48, 4294901760
    %229 = vmatpush.msra.mxu0 %v228
    %v230 = vand.u32 %v44, 4294901760
    %231 = vmatpush.msra.mxu0 %v230
    %v232 = vand.u32 %v53, 4294901760
    %v233 = vsub.f32 %v53, %v232
    %v234 = vand.u32 %v233, 4294901760
    %v235 = vsub.f32 %v233, %v234
    %v236 = vand.u32 %v235, 4294901760
    %237 = vmatmul.f32.gmra.mxu0 %v236
    %v238 = vpop.f32.mrf.mxu0
    %v239 = vadd.f32 0.0, %v238
    %240 = vdwg.mxu0
    %241 = vmatpush.msra.mxu0 0.0
    %242 = vmatpush.msra.mxu0 0.0
    %243 = vmatpush.msra.mxu0 0.0
    %244 = vmatpush.msra.mxu0 0.0
    %245 = vmatpush.msra.mxu0 0.0
    %246 = vmatpush.msra.mxu0 0.0
    %247 = vmatpush.msra.mxu0 0.0
    %248 = vmatpush.msra.mxu0 0.0
    %249 = vmatpush.msra.mxu0 0.0
    %250 = vmatpush.msra.mxu0 0.0
    %251 = vmatpush.msra.mxu0 0.0
    %252 = vmatpush.msra.mxu0 0.0
    %253 = vmatpush.msra.mxu0 0.0
    %254 = vmatpush.msra.mxu0 0.0
    %v255 = vand.u32 %v48, 4294901760
    %v256 = vsub.f32 %v48, %v255
    %v257 = vand.u32 %v256, 4294901760
    %v258 = vsub.f32 %v256, %v257
    %v259 = vand.u32 %v258, 4294901760
    %260 = vmatpush.msra.mxu0 %v259
    %v261 = vand.u32 %v44, 4294901760
    %v262 = vsub.f32 %v44, %v261
    %v263 = vand.u32 %v262, 4294901760
    %v264 = vsub.f32 %v262, %v263
    %v265 = vand.u32 %v264, 4294901760
    %266 = vmatpush.msra.mxu0 %v265
    %v267 = vand.u32 %v53, 4294901760
    %268 = vmatmul.f32.gmra.mxu0 %v267
    %v269 = vpop.f32.mrf.mxu0
    %v270 = vadd.f32 %v239, %v269
    %271 = vdwg.mxu0
    %272 = vmatpush.msra.mxu0 0.0
    %273 = vmatpush.msra.mxu0 0.0
    %274 = vmatpush.msra.mxu0 0.0
    %275 = vmatpush.msra.mxu0 0.0
    %276 = vmatpush.msra.mxu0 0.0
    %277 = vmatpush.msra.mxu0 0.0
    %278 = vmatpush.msra.mxu0 0.0
    %279 = vmatpush.msra.mxu0 0.0
    %280 = vmatpush.msra.mxu0 0.0
    %281 = vmatpush.msra.mxu0 0.0
    %282 = vmatpush.msra.mxu0 0.0
    %283 = vmatpush.msra.mxu0 0.0
    %284 = vmatpush.msra.mxu0 0.0
    %285 = vmatpush.msra.mxu0 0.0
    %v286 = vand.u32 %v48, 4294901760
    %v287 = vsub.f32 %v48, %v286
    %288 = vmatpush.msra.mxu0 %v287
    %v289 = vand.u32 %v44, 4294901760
    %v290 = vsub.f32 %v44, %v289
    %291 = vmatpush.msra.mxu0 %v290
    %v292 = vand.u32 %v53, 4294901760
    %v293 = vsub.f32 %v53, %v292
    %294 = vmatmul.f32.gmra.mxu0 %v293
    %v295 = vpop.f32.mrf.mxu0
    %v296 = vadd.f32 %v270, %v295
    %297 = vdwg.mxu0
    %298 = vmatpush.msra.mxu0 0.0
    %299 = vmatpush.msra.mxu0 0.0
    %300 = vmatpush.msra.mxu0 0.0
    %301 = vmatpush.msra.mxu0 0.0
    %302 = vmatpush.msra.mxu0 0.0
    %303 = vmatpush.msra.mxu0 0.0
    %304 = vmatpush.msra.mxu0 0.0
    %305 = vmatpush.msra.mxu0 0.0
    %306 = vmatpush.msra.mxu0 0.0
    %307 = vmatpush.msra.mxu0 0.0
    %308 = vmatpush.msra.mxu0 0.0
    %309 = vmatpush.msra.mxu0 0.0
    %310 = vmatpush.msra.mxu0 0.0
    %311 = vmatpush.msra.mxu0 0.0
    %v312 = vand.u32 %v48, 4294901760
    %313 = vmatpush.msra.mxu0 %v312
    %v314 = vand.u32 %v44, 4294901760
    %315 = vmatpush.msra.mxu0 %v314
    %v316 = vand.u32 %v53, 4294901760
    %v317 = vsub.f32 %v53, %v316
    %v318 = vand.u32 %v317, 4294901760
    %319 = vmatmul.f32.gmra.mxu0 %v318
    %v320 = vpop.f32.mrf.mxu0
    %v321 = vadd.f32 %v296, %v320
    %322 = vdwg.mxu0
    %323 = vmatpush.msra.mxu0 0.0
    %324 = vmatpush.msra.mxu0 0.0
    %325 = vmatpush.msra.mxu0 0.0
    %326 = vmatpush.msra.mxu0 0.0
    %327 = vmatpush.msra.mxu0 0.0
    %328 = vmatpush.msra.mxu0 0.0
    %329 = vmatpush.msra.mxu0 0.0
    %330 = vmatpush.msra.mxu0 0.0
    %331 = vmatpush.msra.mxu0 0.0
    %332 = vmatpush.msra.mxu0 0.0
    %333 = vmatpush.msra.mxu0 0.0
    %334 = vmatpush.msra.mxu0 0.0
    %335 = vmatpush.msra.mxu0 0.0
    %336 = vmatpush.msra.mxu0 0.0
    %v337 = vand.u32 %v48, 4294901760
    %v338 = vsub.f32 %v48, %v337
    %v339 = vand.u32 %v338, 4294901760
    %340 = vmatpush.msra.mxu0 %v339
    %v341 = vand.u32 %v44, 4294901760
    %v342 = vsub.f32 %v44, %v341
    %v343 = vand.u32 %v342, 4294901760
    %344 = vmatpush.msra.mxu0 %v343
    %v345 = vand.u32 %v53, 4294901760
    %346 = vmatmul.f32.gmra.mxu0 %v345
    %v347 = vpop.f32.mrf.mxu0
    %v348 = vadd.f32 %v321, %v347
    %349 = vdwg.mxu0
    %350 = vmatpush.msra.mxu0 0.0
    %351 = vmatpush.msra.mxu0 0.0
    %352 = vmatpush.msra.mxu0 0.0
    %353 = vmatpush.msra.mxu0 0.0
    %354 = vmatpush.msra.mxu0 0.0
    %355 = vmatpush.msra.mxu0 0.0
    %356 = vmatpush.msra.mxu0 0.0
    %357 = vmatpush.msra.mxu0 0.0
    %358 = vmatpush.msra.mxu0 0.0
    %359 = vmatpush.msra.mxu0 0.0
    %360 = vmatpush.msra.mxu0 0.0
    %361 = vmatpush.msra.mxu0 0.0
    %362 = vmatpush.msra.mxu0 0.0
    %363 = vmatpush.msra.mxu0 0.0
    %v364 = vand.u32 %v48, 4294901760
    %365 = vmatpush.msra.mxu0 %v364
    %v366 = vand.u32 %v44, 4294901760
    %367 = vmatpush.msra.mxu0 %v366
    %v368 = vand.u32 %v53, 4294901760
    %369 = vmatmul.f32.gmra.mxu0 %v368
    %v370 = vpop.f32.mrf.mxu0
    %v371 = vadd.f32 %v348, %v370
    %372 = vdwg.mxu0
    %373 = vmatpush.msra.mxu0 0.0
    %374 = vmatpush.msra.mxu0 0.0
    %375 = vmatpush.msra.mxu0 0.0
    %376 = vmatpush.msra.mxu0 0.0
    %377 = vmatpush.msra.mxu0 0.0
    %378 = vmatpush.msra.mxu0 0.0
    %379 = vmatpush.msra.mxu0 0.0
    %380 = vmatpush.msra.mxu0 0.0
    %381 = vmatpush.msra.mxu0 0.0
    %382 = vmatpush.msra.mxu0 0.0
    %383 = vmatpush.msra.mxu0 0.0
    %384 = vmatpush.msra.mxu0 0.0
    %385 = vmatpush.msra.mxu0 0.0
    %386 = vmatpush.msra.mxu0 0.0
    %v387 = vand.u32 %v49, 4294901760
    %388 = vmatpush.msra.mxu0 %v387
    %v389 = vand.u32 %v45, 4294901760
    %390 = vmatpush.msra.mxu0 %v389
    %v391 = vand.u32 %v53, 4294901760
    %v392 = vsub.f32 %v53, %v391
    %v393 = vand.u32 %v392, 4294901760
    %v394 = vsub.f32 %v392, %v393
    %v395 = vand.u32 %v394, 4294901760
    %396 = vmatmul.f32.gmra.mxu0 %v395
    %v397 = vpop.f32.mrf.mxu0
    %v398 = vadd.f32 0.0, %v397
    %399 = vdwg.mxu0
    %400 = vmatpush.msra.mxu0 0.0
    %401 = vmatpush.msra.mxu0 0.0
    %402 = vmatpush.msra.mxu0 0.0
    %403 = vmatpush.msra.mxu0 0.0
    %404 = vmatpush.msra.mxu0 0.0
    %405 = vmatpush.msra.mxu0 0.0
    %406 = vmatpush.msra.mxu0 0.0
    %407 = vmatpush.msra.mxu0 0.0
    %408 = vmatpush.msra.mxu0 0.0
    %409 = vmatpush.msra.mxu0 0.0
    %410 = vmatpush.msra.mxu0 0.0
    %411 = vmatpush.msra.mxu0 0.0
    %412 = vmatpush.msra.mxu0 0.0
    %413 = vmatpush.msra.mxu0 0.0
    %v414 = vand.u32 %v49, 4294901760
    %v415 = vsub.f32 %v49, %v414
    %v416 = vand.u32 %v415, 4294901760
    %v417 = vsub.f32 %v415, %v416
    %v418 = vand.u32 %v417, 4294901760
    %419 = vmatpush.msra.mxu0 %v418
    %v420 = vand.u32 %v45, 4294901760
    %v421 = vsub.f32 %v45, %v420
    %v422 = vand.u32 %v421, 4294901760
    %v423 = vsub.f32 %v421, %v422
    %v424 = vand.u32 %v423, 4294901760
    %425 = vmatpush.msra.mxu0 %v424
    %v426 = vand.u32 %v53, 4294901760
    %427 = vmatmul.f32.gmra.mxu0 %v426
    %v428 = vpop.f32.mrf.mxu0
    %v429 = vadd.f32 %v398, %v428
    %430 = vdwg.mxu0
    %431 = vmatpush.msra.mxu0 0.0
    %432 = vmatpush.msra.mxu0 0.0
    %433 = vmatpush.msra.mxu0 0.0
    %434 = vmatpush.msra.mxu0 0.0
    %435 = vmatpush.msra.mxu0 0.0
    %436 = vmatpush.msra.mxu0 0.0
    %437 = vmatpush.msra.mxu0 0.0
    %438 = vmatpush.msra.mxu0 0.0
    %439 = vmatpush.msra.mxu0 0.0
    %440 = vmatpush.msra.mxu0 0.0
    %441 = vmatpush.msra.mxu0 0.0
    %442 = vmatpush.msra.mxu0 0.0
    %443 = vmatpush.msra.mxu0 0.0
    %444 = vmatpush.msra.mxu0 0.0
    %v445 = vand.u32 %v49, 4294901760
    %v446 = vsub.f32 %v49, %v445
    %447 = vmatpush.msra.mxu0 %v446
    %v448 = vand.u32 %v45, 4294901760
    %v449 = vsub.f32 %v45, %v448
    %450 = vmatpush.msra.mxu0 %v449
    %v451 = vand.u32 %v53, 4294901760
    %v452 = vsub.f32 %v53, %v451
    %453 = vmatmul.f32.gmra.mxu0 %v452
    %v454 = vpop.f32.mrf.mxu0
    %v455 = vadd.f32 %v429, %v454
    %456 = vdwg.mxu0
    %457 = vmatpush.msra.mxu0 0.0
    %458 = vmatpush.msra.mxu0 0.0
    %459 = vmatpush.msra.mxu0 0.0
    %460 = vmatpush.msra.mxu0 0.0
    %461 = vmatpush.msra.mxu0 0.0
    %462 = vmatpush.msra.mxu0 0.0
    %463 = vmatpush.msra.mxu0 0.0
    %464 = vmatpush.msra.mxu0 0.0
    %465 = vmatpush.msra.mxu0 0.0
    %466 = vmatpush.msra.mxu0 0.0
    %467 = vmatpush.msra.mxu0 0.0
    %468 = vmatpush.msra.mxu0 0.0
    %469 = vmatpush.msra.mxu0 0.0
    %470 = vmatpush.msra.mxu0 0.0
    %v471 = vand.u32 %v49, 4294901760
    %472 = vmatpush.msra.mxu0 %v471
    %v473 = vand.u32 %v45, 4294901760
    %474 = vmatpush.msra.mxu0 %v473
    %v475 = vand.u32 %v53, 4294901760
    %v476 = vsub.f32 %v53, %v475
    %v477 = vand.u32 %v476, 4294901760
    %478 = vmatmul.f32.gmra.mxu0 %v477
    %v479 = vpop.f32.mrf.mxu0
    %v480 = vadd.f32 %v455, %v479
    %481 = vdwg.mxu0
    %482 = vmatpush.msra.mxu0 0.0
    %483 = vmatpush.msra.mxu0 0.0
    %484 = vmatpush.msra.mxu0 0.0
    %485 = vmatpush.msra.mxu0 0.0
    %486 = vmatpush.msra.mxu0 0.0
    %487 = vmatpush.msra.mxu0 0.0
    %488 = vmatpush.msra.mxu0 0.0
    %489 = vmatpush.msra.mxu0 0.0
    %490 = vmatpush.msra.mxu0 0.0
    %491 = vmatpush.msra.mxu0 0.0
    %492 = vmatpush.msra.mxu0 0.0
    %493 = vmatpush.msra.mxu0 0.0
    %494 = vmatpush.msra.mxu0 0.0
    %495 = vmatpush.msra.mxu0 0.0
    %v496 = vand.u32 %v49, 4294901760
    %v497 = vsub.f32 %v49, %v496
    %v498 = vand.u32 %v497, 4294901760
    %499 = vmatpush.msra.mxu0 %v498
    %v500 = vand.u32 %v45, 4294901760
    %v501 = vsub.f32 %v45, %v500
    %v502 = vand.u32 %v501, 4294901760
    %503 = vmatpush.msra.mxu0 %v502
    %v504 = vand.u32 %v53, 4294901760
    %505 = vmatmul.f32.gmra.mxu0 %v504
    %v506 = vpop.f32.mrf.mxu0
    %v507 = vadd.f32 %v480, %v506
    %508 = vdwg.mxu0
    %509 = vmatpush.msra.mxu0 0.0
    %510 = vmatpush.msra.mxu0 0.0
    %511 = vmatpush.msra.mxu0 0.0
    %512 = vmatpush.msra.mxu0 0.0
    %513 = vmatpush.msra.mxu0 0.0
    %514 = vmatpush.msra.mxu0 0.0
    %515 = vmatpush.msra.mxu0 0.0
    %516 = vmatpush.msra.mxu0 0.0
    %517 = vmatpush.msra.mxu0 0.0
    %518 = vmatpush.msra.mxu0 0.0
    %519 = vmatpush.msra.mxu0 0.0
    %520 = vmatpush.msra.mxu0 0.0
    %521 = vmatpush.msra.mxu0 0.0
    %522 = vmatpush.msra.mxu0 0.0
    %v523 = vand.u32 %v49, 4294901760
    %524 = vmatpush.msra.mxu0 %v523
    %v525 = vand.u32 %v45, 4294901760
    %526 = vmatpush.msra.mxu0 %v525
    %v527 = vand.u32 %v53, 4294901760
    %528 = vmatmul.f32.gmra.mxu0 %v527
    %v529 = vpop.f32.mrf.mxu0
    %v530 = vadd.f32 %v507, %v529
    %531 = vdwg.mxu0
    %532 = vmatpush.msra.mxu0 0.0
    %533 = vmatpush.msra.mxu0 0.0
    %534 = vmatpush.msra.mxu0 0.0
    %535 = vmatpush.msra.mxu0 0.0
    %536 = vmatpush.msra.mxu0 0.0
    %537 = vmatpush.msra.mxu0 0.0
    %538 = vmatpush.msra.mxu0 0.0
    %539 = vmatpush.msra.mxu0 0.0
    %540 = vmatpush.msra.mxu0 0.0
    %541 = vmatpush.msra.mxu0 0.0
    %542 = vmatpush.msra.mxu0 0.0
    %543 = vmatpush.msra.mxu0 0.0
    %544 = vmatpush.msra.mxu0 0.0
    %545 = vmatpush.msra.mxu0 0.0
    %v546 = vand.u32 %v50, 4294901760
    %547 = vmatpush.msra.mxu0 %v546
    %v548 = vand.u32 %v46, 4294901760
    %549 = vmatpush.msra.mxu0 %v548
    %v550 = vand.u32 %v53, 4294901760
    %v551 = vsub.f32 %v53, %v550
    %v552 = vand.u32 %v551, 4294901760
    %v553 = vsub.f32 %v551, %v552
    %v554 = vand.u32 %v553, 4294901760
    %555 = vmatmul.f32.gmra.mxu0 %v554
    %v556 = vpop.f32.mrf.mxu0
    %v557 = vadd.f32 0.0, %v556
    %558 = vdwg.mxu0
    %559 = vmatpush.msra.mxu0 0.0
    %560 = vmatpush.msra.mxu0 0.0
    %561 = vmatpush.msra.mxu0 0.0
    %562 = vmatpush.msra.mxu0 0.0
    %563 = vmatpush.msra.mxu0 0.0
    %564 = vmatpush.msra.mxu0 0.0
    %565 = vmatpush.msra.mxu0 0.0
    %566 = vmatpush.msra.mxu0 0.0
    %567 = vmatpush.msra.mxu0 0.0
    %568 = vmatpush.msra.mxu0 0.0
    %569 = vmatpush.msra.mxu0 0.0
    %570 = vmatpush.msra.mxu0 0.0
    %571 = vmatpush.msra.mxu0 0.0
    %572 = vmatpush.msra.mxu0 0.0
    %v573 = vand.u32 %v50, 4294901760
    %v574 = vsub.f32 %v50, %v573
    %v575 = vand.u32 %v574, 4294901760
    %v576 = vsub.f32 %v574, %v575
    %v577 = vand.u32 %v576, 4294901760
    %578 = vmatpush.msra.mxu0 %v577
    %v579 = vand.u32 %v46, 4294901760
    %v580 = vsub.f32 %v46, %v579
    %v581 = vand.u32 %v580, 4294901760
    %v582 = vsub.f32 %v580, %v581
    %v583 = vand.u32 %v582, 4294901760
    %584 = vmatpush.msra.mxu0 %v583
    %v585 = vand.u32 %v53, 4294901760
    %586 = vmatmul.f32.gmra.mxu0 %v585
    %v587 = vpop.f32.mrf.mxu0
    %v588 = vadd.f32 %v557, %v587
    %589 = vdwg.mxu0
    %590 = vmatpush.msra.mxu0 0.0
    %591 = vmatpush.msra.mxu0 0.0
    %592 = vmatpush.msra.mxu0 0.0
    %593 = vmatpush.msra.mxu0 0.0
    %594 = vmatpush.msra.mxu0 0.0
    %595 = vmatpush.msra.mxu0 0.0
    %596 = vmatpush.msra.mxu0 0.0
    %597 = vmatpush.msra.mxu0 0.0
    %598 = vmatpush.msra.mxu0 0.0
    %599 = vmatpush.msra.mxu0 0.0
    %600 = vmatpush.msra.mxu0 0.0
    %601 = vmatpush.msra.mxu0 0.0
    %602 = vmatpush.msra.mxu0 0.0
    %603 = vmatpush.msra.mxu0 0.0
    %v604 = vand.u32 %v50, 4294901760
    %v605 = vsub.f32 %v50, %v604
    %606 = vmatpush.msra.mxu0 %v605
    %v607 = vand.u32 %v46, 4294901760
    %v608 = vsub.f32 %v46, %v607
    %609 = vmatpush.msra.mxu0 %v608
    %v610 = vand.u32 %v53, 4294901760
    %v611 = vsub.f32 %v53, %v610
    %612 = vmatmul.f32.gmra.mxu0 %v611
    %v613 = vpop.f32.mrf.mxu0
    %v614 = vadd.f32 %v588, %v613
    %615 = vdwg.mxu0
    %616 = vmatpush.msra.mxu0 0.0
    %617 = vmatpush.msra.mxu0 0.0
    %618 = vmatpush.msra.mxu0 0.0
    %619 = vmatpush.msra.mxu0 0.0
    %620 = vmatpush.msra.mxu0 0.0
    %621 = vmatpush.msra.mxu0 0.0
    %622 = vmatpush.msra.mxu0 0.0
    %623 = vmatpush.msra.mxu0 0.0
    %624 = vmatpush.msra.mxu0 0.0
    %625 = vmatpush.msra.mxu0 0.0
    %626 = vmatpush.msra.mxu0 0.0
    %627 = vmatpush.msra.mxu0 0.0
    %628 = vmatpush.msra.mxu0 0.0
    %629 = vmatpush.msra.mxu0 0.0
    %v630 = vand.u32 %v50, 4294901760
    %631 = vmatpush.msra.mxu0 %v630
    %v632 = vand.u32 %v46, 4294901760
    %633 = vmatpush.msra.mxu0 %v632
    %v634 = vand.u32 %v53, 4294901760
    %v635 = vsub.f32 %v53, %v634
    %v636 = vand.u32 %v635, 4294901760
    %637 = vmatmul.f32.gmra.mxu0 %v636
    %v638 = vpop.f32.mrf.mxu0
    %v639 = vadd.f32 %v614, %v638
    %640 = vdwg.mxu0
    %641 = vmatpush.msra.mxu0 0.0
    %642 = vmatpush.msra.mxu0 0.0
    %643 = vmatpush.msra.mxu0 0.0
    %644 = vmatpush.msra.mxu0 0.0
    %645 = vmatpush.msra.mxu0 0.0
    %646 = vmatpush.msra.mxu0 0.0
    %647 = vmatpush.msra.mxu0 0.0
    %648 = vmatpush.msra.mxu0 0.0
    %649 = vmatpush.msra.mxu0 0.0
    %650 = vmatpush.msra.mxu0 0.0
    %651 = vmatpush.msra.mxu0 0.0
    %652 = vmatpush.msra.mxu0 0.0
    %653 = vmatpush.msra.mxu0 0.0
    %654 = vmatpush.msra.mxu0 0.0
    %v655 = vand.u32 %v50, 4294901760
    %v656 = vsub.f32 %v50, %v655
    %v657 = vand.u32 %v656, 4294901760
    %658 = vmatpush.msra.mxu0 %v657
    %v659 = vand.u32 %v46, 4294901760
    %v660 = vsub.f32 %v46, %v659
    %v661 = vand.u32 %v660, 4294901760
    %662 = vmatpush.msra.mxu0 %v661
    %v663 = vand.u32 %v53, 4294901760
    %664 = vmatmul.f32.gmra.mxu0 %v663
    %v665 = vpop.f32.mrf.mxu0
    %v666 = vadd.f32 %v639, %v665
    %667 = vdwg.mxu0
    %668 = vmatpush.msra.mxu0 0.0
    %669 = vmatpush.msra.mxu0 0.0
    %670 = vmatpush.msra.mxu0 0.0
    %671 = vmatpush.msra.mxu0 0.0
    %672 = vmatpush.msra.mxu0 0.0
    %673 = vmatpush.msra.mxu0 0.0
    %674 = vmatpush.msra.mxu0 0.0
    %675 = vmatpush.msra.mxu0 0.0
    %676 = vmatpush.msra.mxu0 0.0
    %677 = vmatpush.msra.mxu0 0.0
    %678 = vmatpush.msra.mxu0 0.0
    %679 = vmatpush.msra.mxu0 0.0
    %680 = vmatpush.msra.mxu0 0.0
    %681 = vmatpush.msra.mxu0 0.0
    %v682 = vand.u32 %v50, 4294901760
    %683 = vmatpush.msra.mxu0 %v682
    %v684 = vand.u32 %v46, 4294901760
    %685 = vmatpush.msra.mxu0 %v684
    %v686 = vand.u32 %v53, 4294901760
    %687 = vmatmul.f32.gmra.mxu0 %v686
    %v688 = vpop.f32.mrf.mxu0
    %v689 = vadd.f32 %v666, %v688
    %690 = vdwg.mxu0
    %v691 = vand.u32 2147483647, %v212
    %vm692 = vcmp.le.f32.partialorder %v691, 0.7853982
    %vm693 = vcmp.lt.s32.totalorder %v212, 0
    %v694 = vand.u32 %v212, 2139095040
    %v695 = vshrl.u32 %v694, 23
    %v696 = vsub.s32 %v695, 127
    %v697 = vand.u32 2147483647, %v212
    %v698 = vand.u32 %v697, 8388607
    %v699 = vor.u32 %v698, 8388608
    %v700 = vsub.s32 0, %v699
    %v701 = vadd.s32 %v696, 1
    %vm702 = vcmp.gt.s32.totalorder %v701, 0
    %v703 = vsel %vm702, %v701, 0
    %v704 = vshrl.u32 %v703, 5
    %v705 = vand.u32 %v703, 31
    %v706 = vsub.s32 32, %v705
    %v707 = vshrl.u32 683565275, %v706
    %v708 = vshll.u32 683565275, %v705
    %v709 = vshrl.u32 2475754826, %v706
    %v710 = vor.u32 %v708, %v709
    %v711 = vshll.u32 2475754826, %v705
    %v712 = vshrl.u32 2131351028, %v706
    %v713 = vor.u32 %v711, %v712
    %v714 = vshll.u32 2131351028, %v705
    %v715 = vshrl.u32 2102212464, %v706
    %v716 = vor.u32 %v714, %v715
    %v717 = vshll.u32 2102212464, %v705
    %v718 = vshrl.u32 920167782, %v706
    %v719 = vor.u32 %v717, %v718
    %v720 = vshll.u32 920167782, %v705
    %v721 = vshrl.u32 1326507024, %v706
    %v722 = vor.u32 %v720, %v721
    %vm723 = vcmp.lt.s32.totalorder %v704, 1
    %vm724 = vcmp.lt.s32.totalorder %v704, 2
    %vm725 = vcmp.lt.s32.totalorder %v704, 3
    %vm726 = vcmp.lt.s32.totalorder %v704, 4
    %v727 = vsel %vm723, %v707, %v710
    %v728 = vsel %vm726, %v716, 2102212464
    %v729 = vsel %vm725, %v713, %v728
    %v730 = vsel %vm724, %v727, %v729
    %v731 = vsel %vm723, %v710, %v713
    %v732 = vsel %vm726, %v719, 920167782
    %v733 = vsel %vm725, %v716, %v732
    %v734 = vsel %vm724, %v731, %v733
    %v735 = vsel %vm723, %v713, %v716
    %v736 = vsel %vm726, %v722, 1326507024
    %v737 = vsel %vm725, %v719, %v736
    %v738 = vsel %vm724, %v735, %v737
    %v739 = vshll.u32 %v699, 8
    %v740 = vand.u32 %v739, 65535
    %v741 = vshrl.u32 %v739, 16
    %v742 = vand.u32 %v738, 65535
    %v743 = vshrl.u32 %v738, 16
    %v744 = vmul.u32 %v740, %v742
    %v745 = vmul.u32 %v740, %v743
    %v746 = vmul.u32 %v741, %v742
    %v747 = vmul.u32 %v741, %v743
    %v748 = vshll.u32 %v745, 16
    %v749 = vshrl.u32 %v745, 16
    %v750 = vshll.u32 %v746, 16
    %v751 = vshrl.u32 %v746, 16
    %vm752 = vc.u32 %v744, %v748
    %v753 = vsel %vm752, 1, 0
    %v754 = vadd.s32 %v744, %v748
    %v755 = vadd.s32 %v747, %v753
    %vm756 = vc.u32 %v754, %v750
    %v757 = vsel %vm756, 1, 0
    %v758 = vadd.s32 %v754, %v750
    %v759 = vadd.s32 %v755, %v757
    %v760 = vadd.s32 %v759, %v749
    %v761 = vadd.s32 %v760, %v751
    %v762 = vand.u32 %v739, 65535
    %v763 = vshrl.u32 %v739, 16
    %v764 = vand.u32 %v734, 65535
    %v765 = vshrl.u32 %v734, 16
    %v766 = vmul.u32 %v762, %v764
    %v767 = vmul.u32 %v762, %v765
    %v768 = vmul.u32 %v763, %v764
    %v769 = vmul.u32 %v763, %v765
    %v770 = vshll.u32 %v767, 16
    %v771 = vshrl.u32 %v767, 16
    %v772 = vshll.u32 %v768, 16
    %v773 = vshrl.u32 %v768, 16
    %vm774 = vc.u32 %v766, %v770
    %v775 = vsel %vm774, 1, 0
    %v776 = vadd.s32 %v766, %v770
    %v777 = vadd.s32 %v769, %v775
    %vm778 = vc.u32 %v776, %v772
    %v779 = vsel %vm778, 1, 0
    %v780 = vadd.s32 %v776, %v772
    %v781 = vadd.s32 %v777, %v779
    %v782 = vadd.s32 %v781, %v771
    %v783 = vadd.s32 %v782, %v773
    %v784 = vmul.u32 %v739, %v730
    %v785 = vadd.s32 %v761, %v780
    %vm786 = vc.u32 %v761, %v780
    %v787 = vadd.s32 %v783, 1
    %v788 = vsel %vm786, %v787, %v783
    %v789 = vadd.s32 %v784, %v788
    %v790 = vadd.s32 %v789, 536870912
    %v791 = vshrl.u32 %v790, 30
    %v792 = vshll.u32 %v791, 30
    %v793 = vsub.s32 %v789, %v792
    %vm794 = vcmp.lt.s32.totalorder %v793, 0
    %v795 = vsub.s32 0, %v793
    %v796 = vsel %vm794, %v795, %v793
    %v797 = vclz %v796
    %v798 = vsub.s32 %v797, 2
    %vm799 = vcmp.gt.s32.totalorder 0, %v798
    %v800 = vsel %vm799, 0, %v798
    %v801 = vsub.s32 32, %v800
    %v802 = vshll.u32 %v793, %v800
    %v803 = vshrl.u32 %v785, %v801
    %v804 = vor.u32 %v802, %v803
    %v805 = vsub.s32 4294967266, %v800
    %v806 = vadd.s32 %v805, 127
    %v807 = vshll.u32 %v806, 23
    %v808 = vor.u32 4788187, %v807
    %v809 = vand.u32 2147483647, %v808
    %v811 = vcvt.s32.f32 %v804
    %v812 = vmul.f32 %v811, %v809
    %v813 = vxor.u32 %v812, 2147483648
    %v814 = vsel %vm693, %v813, %v812
    %v815 = vsub.s32 4, %v791
    %v816 = vsel %vm693, %v815, %v791
    %v817 = vsel %vm692, %v212, %v814
    %v818 = vsel %vm692, 0, %v816
    %v819 = vmul.f32 %v817, %v817
    %v820 = vmul.f32 %v819, -0.001358992
    %v821 = vadd.f32 %v820, 0.041655596
    %v822 = vmul.f32 %v819, %v821
    %v823 = vadd.f32 %v822, -0.4999988
    %v824 = vmul.f32 %v819, %v823
    %v825 = vadd.f32 1.0, %v824
    %v826 = vmul.f32 %v817, %v817
    %v827 = vmul.f32 %v826, -0.00019511016
    %v828 = vadd.f32 %v827, 0.008332121
    %v829 = vmul.f32 %v826, %v828
    %v830 = vadd.f32 %v829, -0.16666654
    %v831 = vmul.f32 %v826, %v830
    %v832 = vadd.f32 %v831, 1.0
    %v833 = vmul.f32 %v832, %v817
    %vm834 = vweird.f32 %v212
    %v835 = vand.u32 %v818, 3
    %vm836 = vcmp.lt.s32.totalorder %v835, 2
    %vm837 = vcmp.eq.s32.totalorder %v835, 0
    %v838 = vxor.u32 %v833, 2147483648
    %v839 = vsel %vm837, %v825, %v838
    %vm840 = vcmp.eq.s32.totalorder %v835, 2
    %v841 = vxor.u32 %v825, 2147483648
    %v842 = vsel %vm840, %v841, %v833
    %v843 = vsel %vm836, %v839, %v842
    %v844 = vsel %vm834, nan, %v843
    %v845 = vand.u32 2147483647, %v371
    %vm846 = vcmp.le.f32.partialorder %v845, 0.7853982
    %vm847 = vcmp.lt.s32.totalorder %v371, 0
    %v848 = vand.u32 %v371, 2139095040
    %v849 = vshrl.u32 %v848, 23
    %v850 = vsub.s32 %v849, 127
    %v851 = vand.u32 2147483647, %v371
    %v852 = vand.u32 %v851, 8388607
    %v853 = vor.u32 %v852, 8388608
    %v854 = vsub.s32 0, %v853
    %v855 = vadd.s32 %v850, 1
    %vm856 = vcmp.gt.s32.totalorder %v855, 0
    %v857 = vsel %vm856, %v855, 0
    %v858 = vshrl.u32 %v857, 5
    %v859 = vand.u32 %v857, 31
    %v860 = vsub.s32 32, %v859
    %v861 = vshrl.u32 683565275, %v860
    %v862 = vshll.u32 683565275, %v859
    %v863 = vshrl.u32 2475754826, %v860
    %v864 = vor.u32 %v862, %v863
    %v865 = vshll.u32 2475754826, %v859
    %v866 = vshrl.u32 2131351028, %v860
    %v867 = vor.u32 %v865, %v866
    %v868 = vshll.u32 2131351028, %v859
    %v869 = vshrl.u32 2102212464, %v860
    %v870 = vor.u32 %v868, %v869
    %v871 = vshll.u32 2102212464, %v859
    %v872 = vshrl.u32 920167782, %v860
    %v873 = vor.u32 %v871, %v872
    %v874 = vshll.u32 920167782, %v859
    %v875 = vshrl.u32 1326507024, %v860
    %v876 = vor.u32 %v874, %v875
    %vm877 = vcmp.lt.s32.totalorder %v858, 1
    %vm878 = vcmp.lt.s32.totalorder %v858, 2
    %vm879 = vcmp.lt.s32.totalorder %v858, 3
    %vm880 = vcmp.lt.s32.totalorder %v858, 4
    %v881 = vsel %vm877, %v861, %v864
    %v882 = vsel %vm880, %v870, 2102212464
    %v883 = vsel %vm879, %v867, %v882
    %v884 = vsel %vm878, %v881, %v883
    %v885 = vsel %vm877, %v864, %v867
    %v886 = vsel %vm880, %v873, 920167782
    %v887 = vsel %vm879, %v870, %v886
    %v888 = vsel %vm878, %v885, %v887
    %v889 = vsel %vm877, %v867, %v870
    %v890 = vsel %vm880, %v876, 1326507024
    %v891 = vsel %vm879, %v873, %v890
    %v892 = vsel %vm878, %v889, %v891
    %v893 = vshll.u32 %v853, 8
    %v894 = vand.u32 %v893, 65535
    %v895 = vshrl.u32 %v893, 16
    %v896 = vand.u32 %v892, 65535
    %v897 = vshrl.u32 %v892, 16
    %v898 = vmul.u32 %v894, %v896
    %v899 = vmul.u32 %v894, %v897
    %v900 = vmul.u32 %v895, %v896
    %v901 = vmul.u32 %v895, %v897
    %v902 = vshll.u32 %v899, 16
    %v903 = vshrl.u32 %v899, 16
    %v904 = vshll.u32 %v900, 16
    %v905 = vshrl.u32 %v900, 16
    %vm906 = vc.u32 %v898, %v902
    %v907 = vsel %vm906, 1, 0
    %v908 = vadd.s32 %v898, %v902
    %v909 = vadd.s32 %v901, %v907
    %vm910 = vc.u32 %v908, %v904
    %v911 = vsel %vm910, 1, 0
    %v912 = vadd.s32 %v908, %v904
    %v913 = vadd.s32 %v909, %v911
    %v914 = vadd.s32 %v913, %v903
    %v915 = vadd.s32 %v914, %v905
    %v916 = vand.u32 %v893, 65535
    %v917 = vshrl.u32 %v893, 16
    %v918 = vand.u32 %v888, 65535
    %v919 = vshrl.u32 %v888, 16
    %v920 = vmul.u32 %v916, %v918
    %v921 = vmul.u32 %v916, %v919
    %v922 = vmul.u32 %v917, %v918
    %v923 = vmul.u32 %v917, %v919
    %v924 = vshll.u32 %v921, 16
    %v925 = vshrl.u32 %v921, 16
    %v926 = vshll.u32 %v922, 16
    %v927 = vshrl.u32 %v922, 16
    %vm928 = vc.u32 %v920, %v924
    %v929 = vsel %vm928, 1, 0
    %v930 = vadd.s32 %v920, %v924
    %v931 = vadd.s32 %v923, %v929
    %vm932 = vc.u32 %v930, %v926
    %v933 = vsel %vm932, 1, 0
    %v934 = vadd.s32 %v930, %v926
    %v935 = vadd.s32 %v931, %v933
    %v936 = vadd.s32 %v935, %v925
    %v937 = vadd.s32 %v936, %v927
    %v938 = vmul.u32 %v893, %v884
    %v939 = vadd.s32 %v915, %v934
    %vm940 = vc.u32 %v915, %v934
    %v941 = vadd.s32 %v937, 1
    %v942 = vsel %vm940, %v941, %v937
    %v943 = vadd.s32 %v938, %v942
    %v944 = vadd.s32 %v943, 536870912
    %v945 = vshrl.u32 %v944, 30
    %v946 = vshll.u32 %v945, 30
    %v947 = vsub.s32 %v943, %v946
    %vm948 = vcmp.lt.s32.totalorder %v947, 0
    %v949 = vsub.s32 0, %v947
    %v950 = vsel %vm948, %v949, %v947
    %v951 = vclz %v950
    %v952 = vsub.s32 %v951, 2
    %vm953 = vcmp.gt.s32.totalorder 0, %v952
    %v954 = vsel %vm953, 0, %v952
    %v955 = vsub.s32 32, %v954
    %v956 = vshll.u32 %v947, %v954
    %v957 = vshrl.u32 %v939, %v955
    %v958 = vor.u32 %v956, %v957
    %v959 = vsub.s32 4294967266, %v954
    %v960 = vadd.s32 %v959, 127
    %v961 = vshll.u32 %v960, 23
    %v962 = vor.u32 4788187, %v961
    %v963 = vand.u32 2147483647, %v962
    %v965 = vcvt.s32.f32 %v958
    %v966 = vmul.f32 %v965, %v963
    %v967 = vxor.u32 %v966, 2147483648
    %v968 = vsel %vm847, %v967, %v966
    %v969 = vsub.s32 4, %v945
    %v970 = vsel %vm847, %v969, %v945
    %v971 = vsel %vm846, %v371, %v968
    %v972 = vsel %vm846, 0, %v970
    %v973 = vmul.f32 %v971, %v971
    %v974 = vmul.f32 %v973, -0.001358992
    %v975 = vadd.f32 %v974, 0.041655596
    %v976 = vmul.f32 %v973, %v975
    %v977 = vadd.f32 %v976, -0.4999988
    %v978 = vmul.f32 %v973, %v977
    %v979 = vadd.f32 1.0, %v978
    %v980 = vmul.f32 %v971, %v971
    %v981 = vmul.f32 %v980, -0.00019511016
    %v982 = vadd.f32 %v981, 0.008332121
    %v983 = vmul.f32 %v980, %v982
    %v984 = vadd.f32 %v983, -0.16666654
    %v985 = vmul.f32 %v980, %v984
    %v986 = vadd.f32 %v985, 1.0
    %v987 = vmul.f32 %v986, %v971
    %vm988 = vweird.f32 %v371
    %v989 = vand.u32 %v972, 3
    %vm990 = vcmp.lt.s32.totalorder %v989, 2
    %vm991 = vcmp.eq.s32.totalorder %v989, 0
    %v992 = vxor.u32 %v987, 2147483648
    %v993 = vsel %vm991, %v979, %v992
    %vm994 = vcmp.eq.s32.totalorder %v989, 2
    %v995 = vxor.u32 %v979, 2147483648
    %v996 = vsel %vm994, %v995, %v987
    %v997 = vsel %vm990, %v993, %v996
    %v998 = vsel %vm988, nan, %v997
    %v999 = vand.u32 2147483647, %v530
    %vm1000 = vcmp.le.f32.partialorder %v999, 0.7853982
    %vm1001 = vcmp.lt.s32.totalorder %v530, 0
    %v1002 = vand.u32 %v530, 2139095040
    %v1003 = vshrl.u32 %v1002, 23
    %v1004 = vsub.s32 %v1003, 127
    %v1005 = vand.u32 2147483647, %v530
    %v1006 = vand.u32 %v1005, 8388607
    %v1007 = vor.u32 %v1006, 8388608
    %v1008 = vsub.s32 0, %v1007
    %v1009 = vadd.s32 %v1004, 1
    %vm1010 = vcmp.gt.s32.totalorder %v1009, 0
    %v1011 = vsel %vm1010, %v1009, 0
    %v1012 = vshrl.u32 %v1011, 5
    %v1013 = vand.u32 %v1011, 31
    %v1014 = vsub.s32 32, %v1013
    %v1015 = vshrl.u32 683565275, %v1014
    %v1016 = vshll.u32 683565275, %v1013
    %v1017 = vshrl.u32 2475754826, %v1014
    %v1018 = vor.u32 %v1016, %v1017
    %v1019 = vshll.u32 2475754826, %v1013
    %v1020 = vshrl.u32 2131351028, %v1014
    %v1021 = vor.u32 %v1019, %v1020
    %v1022 = vshll.u32 2131351028, %v1013
    %v1023 = vshrl.u32 2102212464, %v1014
    %v1024 = vor.u32 %v1022, %v1023
    %v1025 = vshll.u32 2102212464, %v1013
    %v1026 = vshrl.u32 920167782, %v1014
    %v1027 = vor.u32 %v1025, %v1026
    %v1028 = vshll.u32 920167782, %v1013
    %v1029 = vshrl.u32 1326507024, %v1014
    %v1030 = vor.u32 %v1028, %v1029
    %vm1031 = vcmp.lt.s32.totalorder %v1012, 1
    %vm1032 = vcmp.lt.s32.totalorder %v1012, 2
    %vm1033 = vcmp.lt.s32.totalorder %v1012, 3
    %vm1034 = vcmp.lt.s32.totalorder %v1012, 4
    %v1035 = vsel %vm1031, %v1015, %v1018
    %v1036 = vsel %vm1034, %v1024, 2102212464
    %v1037 = vsel %vm1033, %v1021, %v1036
    %v1038 = vsel %vm1032, %v1035, %v1037
    %v1039 = vsel %vm1031, %v1018, %v1021
    %v1040 = vsel %vm1034, %v1027, 920167782
    %v1041 = vsel %vm1033, %v1024, %v1040
    %v1042 = vsel %vm1032, %v1039, %v1041
    %v1043 = vsel %vm1031, %v1021, %v1024
    %v1044 = vsel %vm1034, %v1030, 1326507024
    %v1045 = vsel %vm1033, %v1027, %v1044
    %v1046 = vsel %vm1032, %v1043, %v1045
    %v1047 = vshll.u32 %v1007, 8
    %v1048 = vand.u32 %v1047, 65535
    %v1049 = vshrl.u32 %v1047, 16
    %v1050 = vand.u32 %v1046, 65535
    %v1051 = vshrl.u32 %v1046, 16
    %v1052 = vmul.u32 %v1048, %v1050
    %v1053 = vmul.u32 %v1048, %v1051
    %v1054 = vmul.u32 %v1049, %v1050
    %v1055 = vmul.u32 %v1049, %v1051
    %v1056 = vshll.u32 %v1053, 16
    %v1057 = vshrl.u32 %v1053, 16
    %v1058 = vshll.u32 %v1054, 16
    %v1059 = vshrl.u32 %v1054, 16
    %vm1060 = vc.u32 %v1052, %v1056
    %v1061 = vsel %vm1060, 1, 0
    %v1062 = vadd.s32 %v1052, %v1056
    %v1063 = vadd.s32 %v1055, %v1061
    %vm1064 = vc.u32 %v1062, %v1058
    %v1065 = vsel %vm1064, 1, 0
    %v1066 = vadd.s32 %v1062, %v1058
    %v1067 = vadd.s32 %v1063, %v1065
    %v1068 = vadd.s32 %v1067, %v1057
    %v1069 = vadd.s32 %v1068, %v1059
    %v1070 = vand.u32 %v1047, 65535
    %v1071 = vshrl.u32 %v1047, 16
    %v1072 = vand.u32 %v1042, 65535
    %v1073 = vshrl.u32 %v1042, 16
    %v1074 = vmul.u32 %v1070, %v1072
    %v1075 = vmul.u32 %v1070, %v1073
    %v1076 = vmul.u32 %v1071, %v1072
    %v1077 = vmul.u32 %v1071, %v1073
    %v1078 = vshll.u32 %v1075, 16
    %v1079 = vshrl.u32 %v1075, 16
    %v1080 = vshll.u32 %v1076, 16
    %v1081 = vshrl.u32 %v1076, 16
    %vm1082 = vc.u32 %v1074, %v1078
    %v1083 = vsel %vm1082, 1, 0
    %v1084 = vadd.s32 %v1074, %v1078
    %v1085 = vadd.s32 %v1077, %v1083
    %vm1086 = vc.u32 %v1084, %v1080
    %v1087 = vsel %vm1086, 1, 0
    %v1088 = vadd.s32 %v1084, %v1080
    %v1089 = vadd.s32 %v1085, %v1087
    %v1090 = vadd.s32 %v1089, %v1079
    %v1091 = vadd.s32 %v1090, %v1081
    %v1092 = vmul.u32 %v1047, %v1038
    %v1093 = vadd.s32 %v1069, %v1088
    %vm1094 = vc.u32 %v1069, %v1088
    %v1095 = vadd.s32 %v1091, 1
    %v1096 = vsel %vm1094, %v1095, %v1091
    %v1097 = vadd.s32 %v1092, %v1096
    %v1098 = vadd.s32 %v1097, 536870912
    %v1099 = vshrl.u32 %v1098, 30
    %v1100 = vshll.u32 %v1099, 30
    %v1101 = vsub.s32 %v1097, %v1100
    %vm1102 = vcmp.lt.s32.totalorder %v1101, 0
    %v1103 = vsub.s32 0, %v1101
    %v1104 = vsel %vm1102, %v1103, %v1101
    %v1105 = vclz %v1104
    %v1106 = vsub.s32 %v1105, 2
    %vm1107 = vcmp.gt.s32.totalorder 0, %v1106
    %v1108 = vsel %vm1107, 0, %v1106
    %v1109 = vsub.s32 32, %v1108
    %v1110 = vshll.u32 %v1101, %v1108
    %v1111 = vshrl.u32 %v1093, %v1109
    %v1112 = vor.u32 %v1110, %v1111
    %v1113 = vsub.s32 4294967266, %v1108
    %v1114 = vadd.s32 %v1113, 127
    %v1115 = vshll.u32 %v1114, 23
    %v1116 = vor.u32 4788187, %v1115
    %v1117 = vand.u32 2147483647, %v1116
    %v1119 = vcvt.s32.f32 %v1112
    %v1120 = vmul.f32 %v1119, %v1117
    %v1121 = vxor.u32 %v1120, 2147483648
    %v1122 = vsel %vm1001, %v1121, %v1120
    %v1123 = vsub.s32 4, %v1099
    %v1124 = vsel %vm1001, %v1123, %v1099
    %v1125 = vsel %vm1000, %v530, %v1122
    %v1126 = vsel %vm1000, 0, %v1124
    %v1127 = vmul.f32 %v1125, %v1125
    %v1128 = vmul.f32 %v1127, -0.001358992
    %v1129 = vadd.f32 %v1128, 0.041655596
    %v1130 = vmul.f32 %v1127, %v1129
    %v1131 = vadd.f32 %v1130, -0.4999988
    %v1132 = vmul.f32 %v1127, %v1131
    %v1133 = vadd.f32 1.0, %v1132
    %v1134 = vmul.f32 %v1125, %v1125
    %v1135 = vmul.f32 %v1134, -0.00019511016
    %v1136 = vadd.f32 %v1135, 0.008332121
    %v1137 = vmul.f32 %v1134, %v1136
    %v1138 = vadd.f32 %v1137, -0.16666654
    %v1139 = vmul.f32 %v1134, %v1138
    %v1140 = vadd.f32 %v1139, 1.0
    %v1141 = vmul.f32 %v1140, %v1125
    %vm1142 = vweird.f32 %v530
    %v1143 = vand.u32 %v1126, 3
    %vm1144 = vcmp.lt.s32.totalorder %v1143, 2
    %vm1145 = vcmp.eq.s32.totalorder %v1143, 0
    %v1146 = vxor.u32 %v1141, 2147483648
    %v1147 = vsel %vm1145, %v1133, %v1146
    %vm1148 = vcmp.eq.s32.totalorder %v1143, 2
    %v1149 = vxor.u32 %v1133, 2147483648
    %v1150 = vsel %vm1148, %v1149, %v1141
    %v1151 = vsel %vm1144, %v1147, %v1150
    %v1152 = vsel %vm1142, nan, %v1151
    %v1153 = vand.u32 2147483647, %v689
    %vm1154 = vcmp.le.f32.partialorder %v1153, 0.7853982
    %vm1155 = vcmp.lt.s32.totalorder %v689, 0
    %v1156 = vand.u32 %v689, 2139095040
    %v1157 = vshrl.u32 %v1156, 23
    %v1158 = vsub.s32 %v1157, 127
    %v1159 = vand.u32 2147483647, %v689
    %v1160 = vand.u32 %v1159, 8388607
    %v1161 = vor.u32 %v1160, 8388608
    %v1162 = vsub.s32 0, %v1161
    %v1163 = vadd.s32 %v1158, 1
    %vm1164 = vcmp.gt.s32.totalorder %v1163, 0
    %v1165 = vsel %vm1164, %v1163, 0
    %v1166 = vshrl.u32 %v1165, 5
    %v1167 = vand.u32 %v1165, 31
    %v1168 = vsub.s32 32, %v1167
    %v1169 = vshrl.u32 683565275, %v1168
    %v1170 = vshll.u32 683565275, %v1167
    %v1171 = vshrl.u32 2475754826, %v1168
    %v1172 = vor.u32 %v1170, %v1171
    %v1173 = vshll.u32 2475754826, %v1167
    %v1174 = vshrl.u32 2131351028, %v1168
    %v1175 = vor.u32 %v1173, %v1174
    %v1176 = vshll.u32 2131351028, %v1167
    %v1177 = vshrl.u32 2102212464, %v1168
    %v1178 = vor.u32 %v1176, %v1177
    %v1179 = vshll.u32 2102212464, %v1167
    %v1180 = vshrl.u32 920167782, %v1168
    %v1181 = vor.u32 %v1179, %v1180
    %v1182 = vshll.u32 920167782, %v1167
    %v1183 = vshrl.u32 1326507024, %v1168
    %v1184 = vor.u32 %v1182, %v1183
    %vm1185 = vcmp.lt.s32.totalorder %v1166, 1
    %vm1186 = vcmp.lt.s32.totalorder %v1166, 2
    %vm1187 = vcmp.lt.s32.totalorder %v1166, 3
    %vm1188 = vcmp.lt.s32.totalorder %v1166, 4
    %v1189 = vsel %vm1185, %v1169, %v1172
    %v1190 = vsel %vm1188, %v1178, 2102212464
    %v1191 = vsel %vm1187, %v1175, %v1190
    %v1192 = vsel %vm1186, %v1189, %v1191
    %v1193 = vsel %vm1185, %v1172, %v1175
    %v1194 = vsel %vm1188, %v1181, 920167782
    %v1195 = vsel %vm1187, %v1178, %v1194
    %v1196 = vsel %vm1186, %v1193, %v1195
    %v1197 = vsel %vm1185, %v1175, %v1178
    %v1198 = vsel %vm1188, %v1184, 1326507024
    %v1199 = vsel %vm1187, %v1181, %v1198
    %v1200 = vsel %vm1186, %v1197, %v1199
    %v1201 = vshll.u32 %v1161, 8
    %v1202 = vand.u32 %v1201, 65535
    %v1203 = vshrl.u32 %v1201, 16
    %v1204 = vand.u32 %v1200, 65535
    %v1205 = vshrl.u32 %v1200, 16
    %v1206 = vmul.u32 %v1202, %v1204
    %v1207 = vmul.u32 %v1202, %v1205
    %v1208 = vmul.u32 %v1203, %v1204
    %v1209 = vmul.u32 %v1203, %v1205
    %v1210 = vshll.u32 %v1207, 16
    %v1211 = vshrl.u32 %v1207, 16
    %v1212 = vshll.u32 %v1208, 16
    %v1213 = vshrl.u32 %v1208, 16
    %vm1214 = vc.u32 %v1206, %v1210
    %v1215 = vsel %vm1214, 1, 0
    %v1216 = vadd.s32 %v1206, %v1210
    %v1217 = vadd.s32 %v1209, %v1215
    %vm1218 = vc.u32 %v1216, %v1212
    %v1219 = vsel %vm1218, 1, 0
    %v1220 = vadd.s32 %v1216, %v1212
    %v1221 = vadd.s32 %v1217, %v1219
    %v1222 = vadd.s32 %v1221, %v1211
    %v1223 = vadd.s32 %v1222, %v1213
    %v1224 = vand.u32 %v1201, 65535
    %v1225 = vshrl.u32 %v1201, 16
    %v1226 = vand.u32 %v1196, 65535
    %v1227 = vshrl.u32 %v1196, 16
    %v1228 = vmul.u32 %v1224, %v1226
    %v1229 = vmul.u32 %v1224, %v1227
    %v1230 = vmul.u32 %v1225, %v1226
    %v1231 = vmul.u32 %v1225, %v1227
    %v1232 = vshll.u32 %v1229, 16
    %v1233 = vshrl.u32 %v1229, 16
    %v1234 = vshll.u32 %v1230, 16
    %v1235 = vshrl.u32 %v1230, 16
    %vm1236 = vc.u32 %v1228, %v1232
    %v1237 = vsel %vm1236, 1, 0
    %v1238 = vadd.s32 %v1228, %v1232
    %v1239 = vadd.s32 %v1231, %v1237
    %vm1240 = vc.u32 %v1238, %v1234
    %v1241 = vsel %vm1240, 1, 0
    %v1242 = vadd.s32 %v1238, %v1234
    %v1243 = vadd.s32 %v1239, %v1241
    %v1244 = vadd.s32 %v1243, %v1233
    %v1245 = vadd.s32 %v1244, %v1235
    %v1246 = vmul.u32 %v1201, %v1192
    %v1247 = vadd.s32 %v1223, %v1242
    %vm1248 = vc.u32 %v1223, %v1242
    %v1249 = vadd.s32 %v1245, 1
    %v1250 = vsel %vm1248, %v1249, %v1245
    %v1251 = vadd.s32 %v1246, %v1250
    %v1252 = vadd.s32 %v1251, 536870912
    %v1253 = vshrl.u32 %v1252, 30
    %v1254 = vshll.u32 %v1253, 30
    %v1255 = vsub.s32 %v1251, %v1254
    %vm1256 = vcmp.lt.s32.totalorder %v1255, 0
    %v1257 = vsub.s32 0, %v1255
    %v1258 = vsel %vm1256, %v1257, %v1255
    %v1259 = vclz %v1258
    %v1260 = vsub.s32 %v1259, 2
    %vm1261 = vcmp.gt.s32.totalorder 0, %v1260
    %v1262 = vsel %vm1261, 0, %v1260
    %v1263 = vsub.s32 32, %v1262
    %v1264 = vshll.u32 %v1255, %v1262
    %v1265 = vshrl.u32 %v1247, %v1263
    %v1266 = vor.u32 %v1264, %v1265
    %v1267 = vsub.s32 4294967266, %v1262
    %v1268 = vadd.s32 %v1267, 127
    %v1269 = vshll.u32 %v1268, 23
    %v1270 = vor.u32 4788187, %v1269
    %v1271 = vand.u32 2147483647, %v1270
    %v1273 = vcvt.s32.f32 %v1266
    %v1274 = vmul.f32 %v1273, %v1271
    %v1275 = vxor.u32 %v1274, 2147483648
    %v1276 = vsel %vm1155, %v1275, %v1274
    %v1277 = vsub.s32 4, %v1253
    %v1278 = vsel %vm1155, %v1277, %v1253
    %v1279 = vsel %vm1154, %v689, %v1276
    %v1280 = vsel %vm1154, 0, %v1278
    %v1281 = vmul.f32 %v1279, %v1279
    %v1282 = vmul.f32 %v1281, -0.001358992
    %v1283 = vadd.f32 %v1282, 0.041655596
    %v1284 = vmul.f32 %v1281, %v1283
    %v1285 = vadd.f32 %v1284, -0.4999988
    %v1286 = vmul.f32 %v1281, %v1285
    %v1287 = vadd.f32 1.0, %v1286
    %v1288 = vmul.f32 %v1279, %v1279
    %v1289 = vmul.f32 %v1288, -0.00019511016
    %v1290 = vadd.f32 %v1289, 0.008332121
    %v1291 = vmul.f32 %v1288, %v1290
    %v1292 = vadd.f32 %v1291, -0.16666654
    %v1293 = vmul.f32 %v1288, %v1292
    %v1294 = vadd.f32 %v1293, 1.0
    %v1295 = vmul.f32 %v1294, %v1279
    %vm1296 = vweird.f32 %v689
    %v1297 = vand.u32 %v1280, 3
    %vm1298 = vcmp.lt.s32.totalorder %v1297, 2
    %vm1299 = vcmp.eq.s32.totalorder %v1297, 0
    %v1300 = vxor.u32 %v1295, 2147483648
    %v1301 = vsel %vm1299, %v1287, %v1300
    %vm1302 = vcmp.eq.s32.totalorder %v1297, 2
    %v1303 = vxor.u32 %v1287, 2147483648
    %v1304 = vsel %vm1302, %v1303, %v1295
    %v1305 = vsel %vm1298, %v1301, %v1304
    %v1306 = vsel %vm1296, nan, %v1305
    %v1311 = vrot.slane %v998, 7
    %v1312 = vrot.slane %v1152, 6
    %v1313 = vrot.slane %v1306, 5
    %vm1314 = vcmask 1040384
    %v1315 = vsel %vm1314, %v844, %v1311
    %vm1316 = vcmask 1042434
    %v1317 = vsel %vm1316, %v1312, %v1313
    %vm1318 = vcmask 1041408
    %v1319 = vsel %vm1318, %v1315, %v1317
    %v1321 = vlaneseq
    %vm1322 = vcmp.ge.s32.totalorder %v1321, 0
    %vm1323 = vcmp.lt.s32.totalorder %v1321, 512
    %vm1324 = vmand %vm1322, %vm1323
    %1325 = vst.msk [vmem:[#allocation7] sm:$0xf] %vm1324, %v1319
    // Predicated region
    $region18: #{tpu_custom_call.1} parent=1 // pred_check
      _
    $region19: #{tpu_custom_call.1} parent=1 // pred_check_branch
      %1327 = sbr.rel (0) target = $region21
    $region20: #{tpu_custom_call.1} parent=1 // pred_region
      %1329 = vsyncadd [#allocation4], 0
      %s1331 = sshll.u32 [#allocation7], 4
      %s1332 = int_to_ptr.vmem [resolvable:$true] %s1331
      %s1333 = sshll.u32 %s2, 4
      %s1334 = int_to_ptr.hbm [resolvable:$true] %s1333
      %1336 = dma.vmem_to_hbm [thread:$0]  %s1332, 64, %s1334, [#allocation4]
    $region21: #{tpu_custom_call.1} parent=1 // pred_fallthru
      _
    // Predicated region
    $region22: #{tpu_custom_call.1} parent=1 // pred_check
      _
    $region23: #{tpu_custom_call.1} parent=1 // pred_check_branch
      %1338 = sbr.rel (0) target = $region25
    $region24: #{tpu_custom_call.1} parent=1 // pred_region
      %1340 = dma.done [#allocation4], 64
    $region25: #{tpu_custom_call.1} parent=1 // pred_fallthru
      _
    %1341 = vsyncpa [#allocation3], 1
    %1342 = vsyncpa [#allocation6], 1
    %1343 = vsyncpa [#allocation4], 1

</llo_original>
